<compile_context>
chip_gen: v6e
topology: v6e:2x2x1
jax: 0.10.0
libtpu: 0.0.40
codegen_flags: <defaults>
</compile_context>

<pallas_src>
import functools
import math

import numpy as np

import jax
import jax.numpy as jnp
from jax.experimental import pallas as pl
from jax.experimental.pallas import tpu as pltpu


# ----------------------------- small helpers --------------------------------

def _round_up(x, m):
    return ((x + m - 1) // m) * m


def _vmem_limit_bytes():
    # Generation-aware scoped-VMEM budget: ~75% of physical (~96 MiB on v5e/v6e,
    # ~48 MiB on v7x); conservative 64 MiB fallback if the query is unavailable.
    try:
        cap = int(getattr(pltpu.get_tpu_info(), "vmem_capacity_bytes", 0))
        if cap > 0:
            return min((cap * 3) // 4, 100 * 1024 * 1024)
    except Exception:
        pass
    return 64 * 1024 * 1024


VMEM_LIMIT_BYTES = _vmem_limit_bytes()


def _resident_spec(arr):
    """Full-array block with a constant index_map -> VMEM resident across the grid."""
    nd = arr.ndim
    return pl.BlockSpec(arr.shape, lambda i, _nd=nd: (0,) * _nd)


def _elu(x):
    # torch.nn.ELU(alpha=1.0)
    return jnp.where(x > 0, x, jnp.expm1(x))


def _mlp3_apply(x, ws):
    """Linear -> ELU -> Linear -> ELU -> Linear on in-VMEM values."""
    w1, b1, w2, b2, w3, b3 = ws
    h = _elu(jnp.dot(x, w1, preferred_element_type=jnp.float32) + b1)
    h = _elu(jnp.dot(h, w2, preferred_element_type=jnp.float32) + b2)
    return jnp.dot(h, w3, preferred_element_type=jnp.float32) + b3


def _dot_t(a, b):
    """a: (N, M), b: (N, K) -> a^T @ b : (M, K), no explicit transpose materialized."""
    return jax.lax.dot_general(a, b, (((0,), (0,)), ((), ())),
                               preferred_element_type=jnp.float32)


# ----------------------------- tiled 3-layer MLP -----------------------------

def _mlp3_kernel(x_ref, w1_ref, b1_ref, w2_ref, b2_ref, w3_ref, b3_ref, o_ref):
    o_ref[...] = _mlp3_apply(
        x_ref[...],
        (w1_ref[...], b1_ref[...], w2_ref[...], b2_ref[...], w3_ref[...], b3_ref[...]))


def mlp3_tiled(x, params, row_block=512):
    """Row-tiled fused MLP; weights get constant index_maps (VMEM resident)."""
    n, din = x.shape
    dout = params[4].shape[1]
    blk = min(row_block, _round_up(n, 8))
    n_pad = _round_up(n, blk)
    x_p = jnp.pad(x, ((0, n_pad - n), (0, 0)))
    out = pl.pallas_call(
        _mlp3_kernel,
        out_shape=jax.ShapeDtypeStruct((n_pad, dout), jnp.float32),
        grid=(n_pad // blk,),
        in_specs=[pl.BlockSpec((blk, din), lambda i: (i, 0))]
                 + [_resident_spec(w) for w in params],
        out_specs=pl.BlockSpec((blk, dout), lambda i: (i, 0)),
        compiler_params=pltpu.CompilerParams(
            dimension_semantics=("parallel",),
            vmem_limit_bytes=VMEM_LIMIT_BYTES),
    )(x_p, *params)
    return out[:n]


# ------------------ Gram-form pairwise (negative squared) distances ----------

def _neg_sqdist_kernel(xi_ref, xjt_ref, ri_ref, rj_ref, o_ref):
    # -D^2 = 2*x_i.x_j - |x_i|^2 - |x_j|^2   (one MXU matmul, no (N,N,3) temp, no sqrt)
    g = jnp.dot(xi_ref[...], xjt_ref[...], preferred_element_type=jnp.float32)
    o_ref[...] = 2.0 * g - ri_ref[...] - rj_ref[...]


def neg_sqdist(pos, tile=512, pad_coord=1.0e4):
    n = pos.shape[0]
    tile = min(tile, _round_up(n, 128))        # 512 at production, full extent when small
    n_pad = _round_up(n, tile)
    # padded atoms sit far away -> never selected by top_k (largest -D^2)
    x = jnp.pad(pos.astype(jnp.float32), ((0, n_pad - n), (0, 0)),
                constant_values=pad_coord)
    r2 = jnp.sum(x * x, axis=1)
    ri = r2[:, None]                  # (n_pad, 1)
    rj = r2[None, :]                  # (1, n_pad)
    xt = x.T                          # (3, n_pad)
    nb = n_pad // tile
    out = pl.pallas_call(
        _neg_sqdist_kernel,
        out_shape=jax.ShapeDtypeStruct((n_pad, n_pad), jnp.float32),
        grid=(nb, nb),
        in_specs=[
            pl.BlockSpec((tile, 3), lambda i, j: (i, 0)),
            pl.BlockSpec((3, tile), lambda i, j: (0, j)),
            pl.BlockSpec((tile, 1), lambda i, j: (i, 0)),
            pl.BlockSpec((1, tile), lambda i, j: (0, j)),
        ],
        out_specs=pl.BlockSpec((tile, tile), lambda i, j: (i, j)),
        compiler_params=pltpu.CompilerParams(
            dimension_semantics=("parallel", "parallel"),
            vmem_limit_bytes=VMEM_LIMIT_BYTES),
    )(x, xt, ri, rj)
    return out[:n, :n]


# --------------------- fused StateUpdate layer (row-tiled) --------------------

def _state_update_kernel(*refs, nn, Ns, Nh, Nk, sdk):
    qp_ref, qpnn_ref, dr_ref = refs[:3]
    out_ref = refs[-1]
    w = [r[...] for r in refs[3:-1]]
    (w1e_edge, w1e_xn, b1e,
     w2_eqk, b2_eqk, w3_eqk, b3_eqk,
     w2_epk, b2_epk, w3_epk, b3_epk,
     w2_evm, b2_evm, w3_evm, b3_evm) = w[:15]
    nqm_w = w[15:21]
    w1q, b1q, w2q, b2q, w3q, b3q = w[21:27]
    w_ppm = w[27]

    qp = qp_ref[...]                     # (B, 4Ns)
    qpnn = qpnn_ref[...]                 # (B, nn, 4Ns)
    dr = dr_ref[...]                     # (B, nn, 4) = [d, r_x, r_y, r_z]
    B = qp.shape[0]
    inv_sdk = 1.0 / sdk

    q = qp[:, :Ns]                                                   # (B, Ns)
    p_c = [qp[:, (1 + c) * Ns:(2 + c) * Ns] for c in range(3)]       # 3 x (B, Ns)
    q_nn = qpnn[:, :, :Ns]                                           # (B, nn, Ns)
    p_nn_c = [qpnn[:, :, (1 + c) * Ns:(2 + c) * Ns] for c in range(3)]
    d3 = dr[:, :, 0:1]                                               # (B, nn, 1)
    r_c = [dr[:, :, 1 + c:2 + c] for c in range(3)]                  # 3 x (B, nn, 1)

    # ---- node features ----
    p_norm = jnp.sqrt(p_c[0] ** 2 + p_c[1] ** 2 + p_c[2] ** 2)       # (B, Ns)
    X_n = jnp.concatenate([q, p_norm], axis=1)                       # (B, 2Ns)

    # ---- per-edge features (X_n slab folded into the first layer, not broadcast) ----
    p_nn_norm = jnp.sqrt(p_nn_c[0] ** 2 + p_nn_c[1] ** 2 + p_nn_c[2] ** 2)
    p_dot_r = sum(r_c[c] * p_c[c][:, None, :] for c in range(3))     # (B, nn, Ns)
    pnn_dot_r = sum(r_c[c] * p_nn_c[c] for c in range(3))            # (B, nn, Ns)
    X_edge = jnp.concatenate([d3, q_nn, p_nn_norm, p_dot_r, pnn_dot_r], axis=2)
    X_edge2 = X_edge.reshape(B * nn, 4 * Ns + 1)

    # merged first layer of eqkm / epkm / evm (one MXU matmul for all three)
    xn_term = jnp.dot(X_n, w1e_xn, preferred_element_type=jnp.float32) + b1e  # (B, 4Ns)
    h1_all = (jnp.dot(X_edge2, w1e_edge, preferred_element_type=jnp.float32)
              .reshape(B, nn, 4 * Ns) + xn_term[:, None, :])
    h1_flat = _elu(h1_all).reshape(B * nn, 4 * Ns)

    def tail(h1, w2, b2, w3, b3):
        h = _elu(jnp.dot(h1, w2, preferred_element_type=jnp.float32) + b2)
        return jnp.dot(h, w3, preferred_element_type=jnp.float32) + b3

    kq = tail(h1_flat[:, 0:Ns], w2_eqk, b2_eqk, w3_eqk, b3_eqk).reshape(B, nn, Nk)
    kp = tail(h1_flat[:, Ns:2 * Ns], w2_epk, b2_epk, w3_epk, b3_epk).reshape(B, nn, 3 * Nk)
    v = tail(h1_flat[:, 2 * Ns:4 * Ns], w2_evm, b2_evm, w3_evm, b3_evm)   # (B*nn, 2Ns)
    v0 = v[:, :Ns].reshape(B, nn, Ns)
    v1 = v[:, Ns:].reshape(B, nn, Ns)

    nqm_out = _mlp3_apply(X_n, nqm_w)                                 # (B, 2*Nh*Nk)

    # ---- attention heads: Zq / Zp folded into the first layer of qpm / ppm;
    #      vector head uses the algebraic split (no (B, 3nn, Ns) value slab) ----
    acc_q = jnp.zeros((B, Ns), jnp.float32)
    acc_p = [jnp.zeros((B, Ns), jnp.float32) for _ in range(3)]
    for h in range(Nh):
        q0h = nqm_out[:, h * Nk:(h + 1) * Nk]                         # (B, Nk)
        q1h = nqm_out[:, (Nh + h) * Nk:(Nh + h + 1) * Nk]             # (B, Nk)

        # scalar head
        sq = jnp.sum(q0h[:, None, :] * kq, axis=-1, keepdims=True) * inv_sdk
        sq = sq - jnp.max(sq, axis=1, keepdims=True)
        eq = jnp.exp(sq)
        mq = eq * pl.reciprocal(jnp.sum(eq, axis=1, keepdims=True), approx=True)
        zq_h = jnp.sum(mq * v0, axis=1)                               # (B, Ns)
        acc_q = acc_q + jnp.dot(zq_h, w1q[h * Ns:(h + 1) * Ns, :],
                                preferred_element_type=jnp.float32)

        # vector head: joint softmax over the 3*nn "virtual" neighbors
        sps = [jnp.sum(q1h[:, None, :] * kp[:, :, t * Nk:(t + 1) * Nk],
                       axis=-1, keepdims=True) * inv_sdk for t in range(3)]
        smax = jnp.maximum(jnp.maximum(jnp.max(sps[0], axis=1, keepdims=True),
                                       jnp.max(sps[1], axis=1, keepdims=True)),
                           jnp.max(sps[2], axis=1, keepdims=True))
        eps_ = [jnp.exp(sp - smax) for sp in sps]
        denom = (jnp.sum(eps_[0], axis=1, keepdims=True)
                 + jnp.sum(eps_[1], axis=1, keepdims=True)
                 + jnp.sum(eps_[2], axis=1, keepdims=True))
        inv = pl.reciprocal(denom, approx=True)                       # (B, 1, 1)
        mp0, mp1, mp2 = (e * inv for e in eps_)
        sum_mp1 = jnp.sum(mp1, axis=1)                                # (B, 1)
        w_ph = w_ppm[h * Ns:(h + 1) * Ns, :]
        for c in range(3):
            zp_hc = (jnp.sum((mp0 * r_c[c]) * v1, axis=1)
                     + sum_mp1 * p_c[c]
                     + jnp.sum(mp2 * p_nn_c[c], axis=1))              # (B, Ns)
            acc_p[c] = acc_p[c] + jnp.dot(zp_hc, w_ph,
                                          preferred_element_type=jnp.float32)

    # ---- qpm tail + residuals; one lane-dense (blk, 4Ns) store ----
    hq = _elu(acc_q + b1q)
    hq = _elu(jnp.dot(hq, w2q, preferred_element_type=jnp.float32) + b2q)
    qh = jnp.dot(hq, w3q, preferred_element_type=jnp.float32) + b3q
    out = jnp.concatenate([q + qh] + [p_c[c] + acc_p[c] for c in range(3)], axis=1)

    # virtual-node zeroing (torch: q[0] *= 0, p[0] *= 0) folded into the kernel
    row0 = (jax.lax.broadcasted_iota(jnp.int32, (B, 1), 0)
            + pl.program_id(0) * B) == 0
    out_ref[...] = jnp.where(row0, 0.0, out)


def state_update_fused(qp, qp_nn, dr, prm, cfg, blk):
    Np_pad, feat = qp.shape
    Ns = feat // 4
    nn = dr.shape[1]
    Nh, Nk = cfg['Nh'], cfg['Nk']

    def split_w1(w1):
        # X_e row order: [d(1), X_n(2Ns), q_nn, p_nn_norm, p_dot_r, pnn_dot_r]
        return (jnp.concatenate([w1[0:1, :], w1[2 * Ns + 1:, :]], axis=0),
                w1[1:2 * Ns + 1, :])

    eq, ep, ev = prm['eqkm'], prm['epkm'], prm['evm']
    eq_e, eq_x = split_w1(eq[0])
    ep_e, ep_x = split_w1(ep[0])
    ev_e, ev_x = split_w1(ev[0])
    w1e_edge = jnp.concatenate([eq_e, ep_e, ev_e], axis=1)            # (4Ns+1, 4Ns)
    w1e_xn = jnp.concatenate([eq_x, ep_x, ev_x], axis=1)              # (2Ns, 4Ns)
    b1e = jnp.concatenate([eq[1], ep[1], ev[1]], axis=1)              # (1, 4Ns)

    weights = [w1e_edge, w1e_xn, b1e,
               eq[2], eq[3], eq[4], eq[5],
               ep[2], ep[3], ep[4], ep[5],
               ev[2], ev[3], ev[4], ev[5],
               *prm['nqm'], *prm['qpm'], prm['ppm'][0]]
    # TODO(synk): pack the resident weights into one slab (static offsets) to trim
    # per-step DMA/semaphore bookkeeping further.

    kernel = functools.partial(_state_update_kernel, nn=nn, Ns=Ns, Nh=Nh, Nk=Nk,
                               sdk=float(np.sqrt(np.float32(Nk))))
    data_specs = [
        pl.BlockSpec((blk, 4 * Ns), lambda i: (i, 0)),
        pl.BlockSpec((blk, nn, 4 * Ns), lambda i: (i, 0, 0)),
        pl.BlockSpec((blk, nn, 4), lambda i: (i, 0, 0)),
    ]
    w_specs = [_resident_spec(w) for w in weights]
    return pl.pallas_call(
        kernel,
        out_shape=jax.ShapeDtypeStruct((Np_pad, 4 * Ns), jnp.float32),
        grid=(Np_pad // blk,),
        in_specs=data_specs + w_specs,
        out_specs=pl.BlockSpec((blk, 4 * Ns), lambda i: (i, 0)),
        compiler_params=pltpu.CompilerParams(
            dimension_semantics=("parallel",),       # shards across v7x's 2 TCs
            vmem_limit_bytes=VMEM_LIMIT_BYTES),
    )(qp, qp_nn, dr, *weights)


# --------------------------- fused StatePoolLayer -----------------------------

def _spl_kernel(*refs, N0, Nh, r_tile, f_pos, f_neg):
    qp_ref, s_ref, rid_ref = refs[:3]
    qr_ref, pr_ref = refs[-2:]
    w = [r[...] for r in refs[3:-2]]
    w1z_h = w[0:Nh]                           # zdm first-layer rows, pre-sliced per head
    b1z, w2z, b2z, w3z, b3z = w[Nh:Nh + 5]
    wv_h = w[Nh + 5:2 * Nh + 5]               # zdm_vec rows, pre-sliced per head

    qp = qp_ref[...]                          # (N, 4*N0), atom axis resident
    s = s_ref[...]                            # (N, 2*Nh)
    rid = rid_ref[...]                        # (N, 1) int32 residue id (0-based)
    N = qp.shape[0]

    q = qp[:, :N0]
    p_c = [qp[:, (1 + c) * N0:(2 + c) * N0] for c in range(3)]

    # masked-softmax bias generated in-kernel (exact constants of (1-M+1e-6)/(M-1e-6))
    col = (jax.lax.broadcasted_iota(jnp.int32, (N, r_tile), 1)
           + pl.program_id(0) * r_tile)
    Fm = jnp.where(rid == col, f_pos, f_neg).astype(jnp.float32)      # (N, r_tile)

    acc_q = jnp.zeros((r_tile, w1z_h[0].shape[1]), jnp.float32)
    acc_p = [jnp.zeros((r_tile, wv_h[0].shape[1]), jnp.float32) for _ in range(3)]
    for h in range(Nh):
        # even channel: scalar pooling weights, masked softmax over atoms (axis 0)
        a = s[:, 2 * h:2 * h + 1] + Fm
        a = a - jnp.max(a, axis=0, keepdims=True)
        ea = jnp.exp(a)
        ma = ea * pl.reciprocal(jnp.sum(ea, axis=0, keepdims=True), approx=True)
        acc_q = acc_q + jnp.dot(_dot_t(ma, q), w1z_h[h],
                                preferred_element_type=jnp.float32)

        # odd channel: vector pooling weights
        b = s[:, 2 * h + 1:2 * h + 2] + Fm
        b = b - jnp.max(b, axis=0, keepdims=True)
        eb = jnp.exp(b)
        mb = eb * pl.reciprocal(jnp.sum(eb, axis=0, keepdims=True), approx=True)
        for c in range(3):
            acc_p[c] = acc_p[c] + jnp.dot(_dot_t(mb, p_c[c]), wv_h[h],
                                          preferred_element_type=jnp.float32)

    h1 = _elu(acc_q + b1z)
    h2 = _elu(jnp.dot(h1, w2z, preferred_element_type=jnp.float32) + b2z)
    qr_ref[...] = jnp.dot(h2, w3z, preferred_element_type=jnp.float32) + b3z
    pr_ref[...] = jnp.concatenate(acc_p, axis=1)                      # lane-dense slab


def state_pool(qp_a, s, rid, prm, cfg, Nr):
    N0, N1, Nh = cfg['N0'], cfg['N1'], cfg['Nh']
    r_tile = min(128, _round_up(Nr, 8))
    Nr_pad = _round_up(Nr, r_tile)
    zdm = prm['zdm']
    w1z_heads = [zdm[0][h::Nh, :] for h in range(Nh)]          # pre-slice outside kernel
    wv_heads = [prm['zdm_vec'][0][h::Nh, :] for h in range(Nh)]
    weights = w1z_heads + list(zdm[1:]) + wv_heads
    f_pos = float(1e-6 / (1.0 - 1e-6))            # F where M == 1
    f_neg = float((1.0 + 1e-6) / (-1e-6))         # F where M == 0
    kernel = functools.partial(_spl_kernel, N0=N0, Nh=Nh, r_tile=r_tile,
                               f_pos=f_pos, f_neg=f_neg)
    qr, pr_flat = pl.pallas_call(
        kernel,
        out_shape=(jax.ShapeDtypeStruct((Nr_pad, N1), jnp.float32),
                   jax.ShapeDtypeStruct((Nr_pad, 3 * N1), jnp.float32)),
        grid=(Nr_pad // r_tile,),
        in_specs=[_resident_spec(qp_a), _resident_spec(s), _resident_spec(rid)]
                 + [_resident_spec(w) for w in weights],
        out_specs=(pl.BlockSpec((r_tile, N1), lambda t: (t, 0)),
                   pl.BlockSpec((r_tile, 3 * N1), lambda t: (t, 0))),
        compiler_params=pltpu.CompilerParams(
            dimension_semantics=("parallel",),
            vmem_limit_bytes=VMEM_LIMIT_BYTES),
    )(qp_a, s, rid, *weights)
    return qr[:Nr], pr_flat[:Nr]


# --------------------------- parameter init ----------------------------------

def init_linear(key, din, dout, bias=True):
    kw, kb = jax.random.split(key)
    bound = 1.0 / math.sqrt(din)
    W = jax.random.uniform(kw, (din, dout), jnp.float32, -bound, bound)
    if not bias:
        return (W,)
    b = jax.random.uniform(kb, (1, dout), jnp.float32, -bound, bound)
    return (W, b)


def init_mlp3(key, dims):
    ks = jax.random.split(key, 3)
    params = []
    for i in range(3):
        params.extend(init_linear(ks[i], dims[i], dims[i + 1]))
    return tuple(params)


def init_pesto_params(key, config):
    N0e, N1e = config['em']['N0'], config['em']['N1']
    k_em, k_sum, k_spl = jax.random.split(key, 3)
    params = {'em': init_mlp3(k_em, [N0e, N1e, N1e, N1e]), 'sum': []}
    layer_keys = jax.random.split(k_sum, len(config['sum']))
    for lk, lp in zip(layer_keys, config['sum']):
        Ns, Nh, Nk = lp['Ns'], lp['Nh'], lp['Nk']
        ks = jax.random.split(lk, 6)
        params['sum'].append({
            'nqm':  init_mlp3(ks[0], [2 * Ns, Ns, Ns, 2 * Nk * Nh]),
            'eqkm': init_mlp3(ks[1], [6 * Ns + 1, Ns, Ns, Nk]),
            'epkm': init_mlp3(ks[2], [6 * Ns + 1, Ns, Ns, 3 * Nk]),
            'evm':  init_mlp3(ks[3], [6 * Ns + 1, 2 * Ns, 2 * Ns, 2 * Ns]),
            'qpm':  init_mlp3(ks[4], [Nh * Ns, Ns, Ns, Ns]),
            'ppm':  init_linear(ks[5], Nh * Ns, Ns, bias=False),
        })
    N0s, N1s, Nhs = config['spl']['N0'], config['spl']['N1'], config['spl']['Nh']
    ks = jax.random.split(k_spl, 3)
    params['spl'] = {
        'sam': init_mlp3(ks[0], [2 * N0s, N0s, N0s, 2 * Nhs]),
        'zdm': init_mlp3(ks[1], [Nhs * N0s, N0s, N0s, N1s]),
        'zdm_vec': init_linear(ks[2], Nhs * N0s, N1s, bias=False),
    }
    return params


# ------------------------------- forward -------------------------------------

def unpack_state_features(X, ids_topk, q):
    N = X.shape[0]
    # torch X[ids_topk - 1] wraps index -1 to the last row (kept for fidelity)
    X_nn = X[(ids_topk - 1) % N]
    R_nn = X_nn - X[:, None, :]
    D_nn = jnp.linalg.norm(R_nn, axis=2)
    D_nn = D_nn + jnp.max(D_nn) * (D_nn < 0.01).astype(jnp.float32)
    R_nn = R_nn / D_nn[:, :, None]
    q = jnp.concatenate([jnp.zeros((1, q.shape[1]), q.dtype), q], axis=0)
    ids_topk = jnp.concatenate(
        [jnp.zeros((1, ids_topk.shape[1]), ids_topk.dtype), ids_topk], axis=0)
    D_nn = jnp.concatenate([jnp.zeros((1, D_nn.shape[1]), D_nn.dtype), D_nn], axis=0)
    R_nn = jnp.concatenate([jnp.zeros((1,) + R_nn.shape[1:], R_nn.dtype), R_nn], axis=0)
    return q, ids_topk, D_nn, R_nn


def pesto_forward(params, config, pos, x0, atom_to_res_map, k_top, row_block=512):
    pos = pos.astype(jnp.float32)
    N = pos.shape[0]

    # ---- get_top_k_m_batch (single-graph batch): -D^2 via Pallas, top-k in XLA ----
    pos_c = pos - jnp.mean(pos, axis=0, keepdims=True)   # center: f32 Gram-form stability
    neg_d2 = neg_sqdist(pos_c)
    # TODO(synk): fuse a streaming per-row top-k into the distance kernel (column-tile
    # grid + running k-best in VMEM scratch) to avoid the dense N x N HBM matrix.
    _, ids_topk = jax.lax.top_k(neg_d2, k_top)           # k smallest distances
    ids_topk = ids_topk.astype(jnp.int32)

    Nr = int(np.max(np.asarray(atom_to_res_map)))        # static residue count
    res_id0 = (jnp.asarray(atom_to_res_map, jnp.int32) - 1)[:, None]   # (N, 1) 0-based
    residue_sizes = [Nr]

    # ---- embedding + unpack_state_features ----
    q = mlp3_tiled(x0.astype(jnp.float32), params['em'], row_block=row_block)
    Ns = q.shape[1]
    q, ids_topk, D_nn, R_nn = unpack_state_features(pos, ids_topk, q)
    Np = q.shape[0]                                       # N + 1 (virtual node)

    # state carried as one lane-dense slab [q | p_x | p_y | p_z]; p starts at zero
    qp = jnp.concatenate([q, jnp.zeros((Np, 3 * Ns), jnp.float32)], axis=1)

    # row block: keep >= 2 grid steps so the parallel axis shards across v7x's 2 TCs
    blk = min(row_block, max(8, _round_up((Np + 1) // 2, 8)))
    Np_pad = _round_up(Np, blk)
    pad = Np_pad - Np
    qp = jnp.pad(qp, ((0, pad), (0, 0)))
    ids_topk = jnp.pad(ids_topk, ((0, pad), (0, 0)))
    D_nn = jnp.pad(D_nn, ((0, pad), (0, 0)))
    R_nn = jnp.pad(R_nn, ((0, pad), (0, 0), (0, 0)))
    # per-edge scalars packed lane-dense once: [d, r_x, r_y, r_z]
    dr_full = jnp.concatenate([D_nn[:, :, None], R_nn], axis=2)       # (Np_pad, k, 4)

    # ---- stack of StateUpdateLayer (each = one fused, row-tiled pallas_call) ----
    # TODO(synk): torch.utils.checkpoint is a backward-pass memory optimization only.
    # TODO(synk): the neighbor gather qp[ids_nn] stays in XLA; an in-kernel gather via
    # scalar-prefetched ids + manual DMA would remove this per-layer HBM round trip.
    # TODO(synk): on v5e the gathered slab could be carried in bf16 (cast after load).
    for lp, lprm in zip(config['sum'], params['sum']):
        nn = lp['nn']
        ids_nn = ids_topk[:, :nn]
        qp_nn = qp[ids_nn]                                # (Np_pad, nn, 4Ns)
        dr = dr_full[:, :nn, :]                           # (Np_pad, nn, 4)
        qp = state_update_fused(qp, qp_nn, dr, lprm, lp, blk)
        # virtual-node zeroing (q[0]*=0, p[0]*=0) is folded into the kernel

    # ---- StatePoolLayer (drop virtual node and row padding) ----
    qp_a = qp[1:N + 1]                                    # (N, 4*N0)
    N0 = config['spl']['N0']
    N1 = config['spl']['N1']
    p_norm = jnp.sqrt(sum(qp_a[:, (1 + c) * N0:(2 + c) * N0] ** 2 for c in range(3)))
    z = jnp.concatenate([qp_a[:, :N0], p_norm], axis=1)
    s = mlp3_tiled(z, params['spl']['sam'], row_block=row_block)      # (N, 2*Nh)
    qr, pr_flat = state_pool(qp_a, s, res_id0, params['spl'], config['spl'], Nr)
    pr = pr_flat.reshape(Nr, 3, N1)
    zr = jnp.concatenate([qr, jnp.linalg.norm(pr, axis=1)], axis=1)
    boundaries = np.cumsum(residue_sizes)[:-1].tolist()
    return tuple(jnp.split(zr, boundaries, axis=0)) if boundaries else (zr,)


# --------------------------------- main ---------------------------------------

if __name__ == "__main__":
    config = {
        'em':  {'N0': 12, 'N1': 16},
        'sum': [{'Ns': 16, 'Nh': 2, 'Nk': 4, 'nn': 8},
                {'Ns': 16, 'Nh': 2, 'Nk': 4, 'nn': 8}],
        'spl': {'N0': 16, 'N1': 8, 'Nh': 2},
    }
    # TODO(synk): original get_top_k_m_batch uses k=64; reduced to 8 for the small graph.
    K_TOP = 8
    N_ATOMS = 40
    N_RES = 6

    key = jax.random.PRNGKey(0)
    k_par, k_pos, k_feat = jax.random.split(key, 3)
    params = init_pesto_params(k_par, config)

    pos = jax.random.normal(k_pos, (N_ATOMS, 3), jnp.float32) * 4.0
    x0 = jax.random.normal(k_feat, (N_ATOMS, config['em']['N0']), jnp.float32)
    atom_to_res_map = (jnp.arange(N_ATOMS, dtype=jnp.int32) % N_RES) + 1  # 1-based ids

    # small row_block so the test exercises multi-step grids; use 256-512 in production
    out = pesto_forward(params, config, pos, x0, atom_to_res_map, K_TOP, row_block=64)
    out = jax.block_until_ready(out)

    assert len(out) == 1
    assert out[0].shape == (N_RES, 2 * config['spl']['N1'])
    assert bool(jnp.isfinite(out[0]).all())
    print("KERNEL_OK")
</pallas_src>

<mosaic_0001>
module attributes {stable_mosaic.version = 11 : i64} {
  func.func @_neg_sqdist_kernel(%arg0: i32, %arg1: i32, %arg2: memref<128x3xf32, #tpu.memory_space<vmem>>, %arg3: memref<3x128xf32, #tpu.memory_space<vmem>>, %arg4: memref<128x1xf32, #tpu.memory_space<vmem>>, %arg5: memref<1x128xf32, #tpu.memory_space<vmem>>, %arg6: memref<128x128xf32, #tpu.memory_space<vmem>>) attributes {dimension_semantics = [#tpu.dimension_semantics<parallel>, #tpu.dimension_semantics<parallel>], iteration_bounds = array<i64: 1, 1>, scalar_prefetch = 0 : i64, scratch_operands = 0 : i64, tpu.core_type = #tpu.core_type<tc>, window_params = [{transform_indices = @transform_0, window_bounds = array<i64: 128, 3>}, {transform_indices = @transform_1, window_bounds = array<i64: 3, 128>}, {transform_indices = @transform_2, window_bounds = array<i64: 128, 1>}, {transform_indices = @transform_3, window_bounds = array<i64: 1, 128>}, {transform_indices = @transform_4, window_bounds = array<i64: 128, 128>}]} {
    %c0 = arith.constant 0 : index
    %c0_0 = arith.constant 0 : index
    %0 = vector.load %arg2[%c0, %c0_0] : memref<128x3xf32, #tpu.memory_space<vmem>>, vector<128x3xf32>
    %c0_1 = arith.constant 0 : index
    %c0_2 = arith.constant 0 : index
    %1 = vector.load %arg3[%c0_1, %c0_2] : memref<3x128xf32, #tpu.memory_space<vmem>>, vector<3x128xf32>
    %cst = arith.constant dense<0.000000e+00> : vector<128x128xf32>
    %2 = tpu.matmul %0, %1, %cst {dimension_numbers = #tpu.dot_dimension_numbers<[1], [0], [0], [1], [0, 0, 1, 1], [], []>} : vector<128x3xf32>, vector<3x128xf32>, vector<128x128xf32> -> vector<128x128xf32>
    %cst_3 = arith.constant 2.000000e+00 : f32
    %3 = vector.broadcast %cst_3 : f32 to vector<128x128xf32>
    %4 = arith.mulf %3, %2 : vector<128x128xf32>
    %c0_4 = arith.constant 0 : index
    %c0_5 = arith.constant 0 : index
    %5 = vector.load %arg4[%c0_4, %c0_5] : memref<128x1xf32, #tpu.memory_space<vmem>>, vector<128x1xf32>
    %6 = vector.broadcast %5 : vector<128x1xf32> to vector<128x128xf32>
    %7 = arith.subf %4, %6 : vector<128x128xf32>
    %c0_6 = arith.constant 0 : index
    %c0_7 = arith.constant 0 : index
    %8 = vector.load %arg5[%c0_6, %c0_7] : memref<1x128xf32, #tpu.memory_space<vmem>>, vector<1x128xf32>
    %9 = vector.broadcast %8 : vector<1x128xf32> to vector<128x128xf32>
    %10 = arith.subf %7, %9 : vector<128x128xf32>
    %c0_8 = arith.constant 0 : index
    %c0_9 = arith.constant 0 : index
    %11 = vector.load %arg6[%c0_8, %c0_9] : memref<128x128xf32, #tpu.memory_space<vmem>>, vector<128x128xf32>
    tpu.vector_store %arg6[%c0_8, %c0_9], %10 {strides = array<i32>} : memref<128x128xf32, #tpu.memory_space<vmem>>, vector<128x128xf32>,
    return
  }
  func.func @transform_0(%arg0: i32, %arg1: i32) -> (i32, i32) {
    %c0_i32 = arith.constant 0 : i32
    %c0_i32_0 = arith.constant 0 : i32
    return %arg0, %c0_i32 : i32, i32
  }
  func.func @transform_1(%arg0: i32, %arg1: i32) -> (i32, i32) {
    %c0_i32 = arith.constant 0 : i32
    %c0_i32_0 = arith.constant 0 : i32
    return %c0_i32, %arg1 : i32, i32
  }
  func.func @transform_2(%arg0: i32, %arg1: i32) -> (i32, i32) {
    %c0_i32 = arith.constant 0 : i32
    %c0_i32_0 = arith.constant 0 : i32
    return %arg0, %c0_i32 : i32, i32
  }
  func.func @transform_3(%arg0: i32, %arg1: i32) -> (i32, i32) {
    %c0_i32 = arith.constant 0 : i32
    %c0_i32_0 = arith.constant 0 : i32
    return %c0_i32, %arg1 : i32, i32
  }
  func.func @transform_4(%arg0: i32, %arg1: i32) -> (i32, i32) {
    %c0_i32 = arith.constant 0 : i32
    return %arg0, %arg1 : i32, i32
  }
}

</mosaic_0001>

<llo_original>
// kernel: tpu_custom_call.1
$region0: #{tpu_custom_call.1}
  #allocation0 [shape = 'u32[]', space=smem, size = 0x4, offset = 0x4, fixed_abs, tag = 'smem constant byte address 0x4 - core index']
  #allocation1 [shape = 'u32[144,128]{1,0:T(1,128)}', space=vmem, size = 0x12000, scoped, tag = 'internal scratch']
  %s0 = inlined_call_operand.vmem [shape: f32[128,3], index: 0, kind: input, shape index: {}]
  %s1 = inlined_call_operand.vmem [shape: f32[3,128], index: 1, kind: input, shape index: {}]
  %s2 = inlined_call_operand.vmem [shape: f32[128,1], index: 2, kind: input, shape index: {}]
  %s3 = inlined_call_operand.vmem [shape: f32[1,128], index: 3, kind: input, shape index: {}]
  %s4 = inlined_call_operand.hbm [shape: f32[128,128], index: 4, kind: output, shape index: {}]
  %s5 = sld [smem:[#allocation0]]
  $region26: #{tpu_custom_call.1} parent=0
    _
  %s7 = ssub.s32 1, %s5
  %s8 = scalar_select 0, %s7, %s5
  $region1: #{tpu_custom_call.1} parent=0
    #allocation2 [shape = 'u8[65536]{0}', space=vmem, size = 0x10000, scoped, tag = 'output window, operand 0, single buffered']
    #allocation3 [shape = 's32[1]{0}', space=sflag, size = 0x4, scoped, tag = 'scoped memory for tpu_custom_call.1']
    %9 = vsyncpa [#allocation3], 0
    // Predicated region
    $region2: #{tpu_custom_call.1} parent=1 // pred_check
      _
    $region3: #{tpu_custom_call.1} parent=1 // pred_check_branch
      %11 = sbr.rel (0) target = $region5
    $region4: #{tpu_custom_call.1} parent=1 // pred_region
      _
    $region5: #{tpu_custom_call.1} parent=1 // pred_fallthru
      _
    // Predicated region
    $region6: #{tpu_custom_call.1} parent=1 // pred_check
      _
    $region7: #{tpu_custom_call.1} parent=1 // pred_check_branch
      %13 = sbr.rel (0) target = $region9
    $region8: #{tpu_custom_call.1} parent=1 // pred_region
      _
    $region9: #{tpu_custom_call.1} parent=1 // pred_fallthru
      _
    // Predicated region
    $region10: #{tpu_custom_call.1} parent=1 // pred_check
      _
    $region11: #{tpu_custom_call.1} parent=1 // pred_check_branch
      %15 = sbr.rel (0) target = $region13
    $region12: #{tpu_custom_call.1} parent=1 // pred_region
      _
    $region13: #{tpu_custom_call.1} parent=1 // pred_fallthru
      _
    // Predicated region
    $region14: #{tpu_custom_call.1} parent=1 // pred_check
      _
    $region15: #{tpu_custom_call.1} parent=1 // pred_check_branch
      %17 = sbr.rel (0) target = $region17
    $region16: #{tpu_custom_call.1} parent=1 // pred_region
      _
    $region17: #{tpu_custom_call.1} parent=1 // pred_fallthru
      _
    %v18 = vld [vmem:[%s0] sm:$0xff]
    %v19 = vld [vmem:[%s0 + $0x8] sm:$0xff]
    %v20 = vld [vmem:[%s0 + $0x10] sm:$0xff]
    %v21 = vld [vmem:[%s0 + $0x18] sm:$0xff]
    %v22 = vld [vmem:[%s0 + $0x20] sm:$0xff]
    %v23 = vld [vmem:[%s0 + $0x28] sm:$0xff]
    %v24 = vld [vmem:[%s0 + $0x30] sm:$0xff]
    %v25 = vld [vmem:[%s0 + $0x38] sm:$0xff]
    %v26 = vld [vmem:[%s0 + $0x40] sm:$0xff]
    %v27 = vld [vmem:[%s0 + $0x48] sm:$0xff]
    %v28 = vld [vmem:[%s0 + $0x50] sm:$0xff]
    %v29 = vld [vmem:[%s0 + $0x58] sm:$0xff]
    %v30 = vld [vmem:[%s0 + $0x60] sm:$0xff]
    %v31 = vld [vmem:[%s0 + $0x68] sm:$0xff]
    %v32 = vld [vmem:[%s0 + $0x70] sm:$0xff]
    %v33 = vld [vmem:[%s0 + $0x78] sm:$0xff]
    %v34 = vld [vmem:[%s1] sm:$0x7]
    %vm35 = vcmask 23552
    %v37 = vsel %vm35, %v18, 0
    %v40 = vsel %vm35, %v19, 0
    %v43 = vsel %vm35, %v20, 0
    %v46 = vsel %vm35, %v21, 0
    %v49 = vsel %vm35, %v22, 0
    %v52 = vsel %vm35, %v23, 0
    %v55 = vsel %vm35, %v24, 0
    %v58 = vsel %vm35, %v25, 0
    %v61 = vsel %vm35, %v26, 0
    %v64 = vsel %vm35, %v27, 0
    %v67 = vsel %vm35, %v28, 0
    %v70 = vsel %vm35, %v29, 0
    %v73 = vsel %vm35, %v30, 0
    %v76 = vsel %vm35, %v31, 0
    %v79 = vsel %vm35, %v32, 0
    %v82 = vsel %vm35, %v33, 0
    %vm84 = vcmask 1042432
    %v86 = vsel %vm84, %v34, 0
    %88 = vmatprep.subr.mxu0 0.0
    %89 = vmatpush1.msra.mxu0 0.0
    %90 = vmatprep.subr.mxu0 0.0
    %91 = vmatpush1.msra.mxu0 0.0
    %92 = vmatprep.subr.mxu0 0.0
    %93 = vmatpush1.msra.mxu0 0.0
    %94 = vmatprep.subr.mxu0 0.0
    %95 = vmatpush1.msra.mxu0 0.0
    %96 = vmatprep.subr.mxu0 0.0
    %97 = vmatpush1.msra.mxu0 0.0
    %98 = vmatprep.subr.mxu0 0.0
    %99 = vmatpush1.msra.mxu0 0.0
    %100 = vmatprep.subr.mxu0 0.0
    %101 = vmatpush1.msra.mxu0 0.0
    %102 = vmatprep.subr.mxu0 0.0
    %103 = vmatpush1.msra.mxu0 0.0
    %104 = vmatprep.subr.mxu0 0.0
    %105 = vmatpush1.msra.mxu0 0.0
    %106 = vmatprep.subr.mxu0 0.0
    %107 = vmatpush1.msra.mxu0 0.0
    %108 = vmatprep.subr.mxu0 0.0
    %109 = vmatpush1.msra.mxu0 0.0
    %110 = vmatprep.subr.mxu0 0.0
    %111 = vmatpush1.msra.mxu0 0.0
    %112 = vmatprep.subr.mxu0 0.0
    %113 = vmatpush1.msra.mxu0 0.0
    %114 = vmatprep.subr.mxu0 0.0
    %115 = vmatpush1.msra.mxu0 0.0
    %116 = vmatprep.subr.mxu0 0.0
    %117 = vmatpush1.msra.mxu0 0.0
    %118 = vmatprep.subr.mxu0 0.0
    %119 = vmatpush1.msra.mxu0 %v86
    %120 = vmatprep.subr.mxu0 0.0
    %121 = vmatpush2.msra.mxu0 0.0
    %122 = vmatprep.subr.mxu0 0.0
    %123 = vmatpush2.msra.mxu0 0.0
    %124 = vmatprep.subr.mxu0 0.0
    %125 = vmatpush2.msra.mxu0 0.0
    %126 = vmatprep.subr.mxu0 0.0
    %127 = vmatpush2.msra.mxu0 0.0
    %128 = vmatprep.subr.mxu0 0.0
    %129 = vmatpush2.msra.mxu0 0.0
    %130 = vmatprep.subr.mxu0 0.0
    %131 = vmatpush2.msra.mxu0 0.0
    %132 = vmatprep.subr.mxu0 0.0
    %133 = vmatpush2.msra.mxu0 0.0
    %134 = vmatprep.subr.mxu0 0.0
    %135 = vmatpush2.msra.mxu0 0.0
    %136 = vmatprep.subr.mxu0 0.0
    %137 = vmatpush2.msra.mxu0 0.0
    %138 = vmatprep.subr.mxu0 0.0
    %139 = vmatpush2.msra.mxu0 0.0
    %140 = vmatprep.subr.mxu0 0.0
    %141 = vmatpush2.msra.mxu0 0.0
    %142 = vmatprep.subr.mxu0 0.0
    %143 = vmatpush2.msra.mxu0 0.0
    %144 = vmatprep.subr.mxu0 0.0
    %145 = vmatpush2.msra.mxu0 0.0
    %146 = vmatprep.subr.mxu0 0.0
    %147 = vmatpush2.msra.mxu0 0.0
    %148 = vmatprep.subr.mxu0 0.0
    %149 = vmatpush2.msra.mxu0 0.0
    %150 = vmatprep.subr.mxu0 0.0
    %151 = vmatpush2.msra.mxu0 0.0
    %152 = vmatprep.mubr.f32.mxu0 0.0
    %153 = vmatmul.mubr.f32.gmra.mxu0 %v37
    %v154 = vpop.f32.mrf.mxu0
    %v155 = vadd.f32 0.0, %v154
    %v156 = vpop.f32.mrf.mxu0
    %157 = vmatprep.mubr.f32.mxu0 0.0
    %158 = vmatmul.mubr.f32.gmra.mxu0 %v40
    %v159 = vpop.f32.mrf.mxu0
    %v160 = vadd.f32 0.0, %v159
    %v161 = vpop.f32.mrf.mxu0
    %162 = vmatprep.mubr.f32.mxu0 0.0
    %163 = vmatmul.mubr.f32.gmra.mxu0 %v43
    %v164 = vpop.f32.mrf.mxu0
    %v165 = vadd.f32 0.0, %v164
    %v166 = vpop.f32.mrf.mxu0
    %167 = vmatprep.mubr.f32.mxu0 0.0
    %168 = vmatmul.mubr.f32.gmra.mxu0 %v46
    %v169 = vpop.f32.mrf.mxu0
    %v170 = vadd.f32 0.0, %v169
    %v171 = vpop.f32.mrf.mxu0
    %172 = vmatprep.mubr.f32.mxu0 0.0
    %173 = vmatmul.mubr.f32.gmra.mxu0 %v49
    %v174 = vpop.f32.mrf.mxu0
    %v175 = vadd.f32 0.0, %v174
    %v176 = vpop.f32.mrf.mxu0
    %177 = vmatprep.mubr.f32.mxu0 0.0
    %178 = vmatmul.mubr.f32.gmra.mxu0 %v52
    %v179 = vpop.f32.mrf.mxu0
    %v180 = vadd.f32 0.0, %v179
    %v181 = vpop.f32.mrf.mxu0
    %182 = vmatprep.mubr.f32.mxu0 0.0
    %183 = vmatmul.mubr.f32.gmra.mxu0 %v55
    %v184 = vpop.f32.mrf.mxu0
    %v185 = vadd.f32 0.0, %v184
    %v186 = vpop.f32.mrf.mxu0
    %187 = vmatprep.mubr.f32.mxu0 0.0
    %188 = vmatmul.mubr.f32.gmra.mxu0 %v58
    %v189 = vpop.f32.mrf.mxu0
    %v190 = vadd.f32 0.0, %v189
    %v191 = vpop.f32.mrf.mxu0
    %192 = vmatprep.mubr.f32.mxu0 0.0
    %193 = vmatmul.mubr.f32.gmra.mxu0 %v61
    %v194 = vpop.f32.mrf.mxu0
    %v195 = vadd.f32 0.0, %v194
    %v196 = vpop.f32.mrf.mxu0
    %197 = vmatprep.mubr.f32.mxu0 0.0
    %198 = vmatmul.mubr.f32.gmra.mxu0 %v64
    %v199 = vpop.f32.mrf.mxu0
    %v200 = vadd.f32 0.0, %v199
    %v201 = vpop.f32.mrf.mxu0
    %202 = vmatprep.mubr.f32.mxu0 0.0
    %203 = vmatmul.mubr.f32.gmra.mxu0 %v67
    %v204 = vpop.f32.mrf.mxu0
    %v205 = vadd.f32 0.0, %v204
    %v206 = vpop.f32.mrf.mxu0
    %207 = vmatprep.mubr.f32.mxu0 0.0
    %208 = vmatmul.mubr.f32.gmra.mxu0 %v70
    %v209 = vpop.f32.mrf.mxu0
    %v210 = vadd.f32 0.0, %v209
    %v211 = vpop.f32.mrf.mxu0
    %212 = vmatprep.mubr.f32.mxu0 0.0
    %213 = vmatmul.mubr.f32.gmra.mxu0 %v73
    %v214 = vpop.f32.mrf.mxu0
    %v215 = vadd.f32 0.0, %v214
    %v216 = vpop.f32.mrf.mxu0
    %217 = vmatprep.mubr.f32.mxu0 0.0
    %218 = vmatmul.mubr.f32.gmra.mxu0 %v76
    %v219 = vpop.f32.mrf.mxu0
    %v220 = vadd.f32 0.0, %v219
    %v221 = vpop.f32.mrf.mxu0
    %222 = vmatprep.mubr.f32.mxu0 0.0
    %223 = vmatmul.mubr.f32.gmra.mxu0 %v79
    %v224 = vpop.f32.mrf.mxu0
    %v225 = vadd.f32 0.0, %v224
    %v226 = vpop.f32.mrf.mxu0
    %227 = vmatprep.mubr.f32.mxu0 0.0
    %228 = vmatmul.mubr.f32.gmra.mxu0 %v82
    %v229 = vpop.f32.mrf.mxu0
    %v230 = vadd.f32 0.0, %v229
    %v231 = vpop.f32.mrf.mxu0
    %232 = vdwg.mxu0
    %v233 = vmul.f32 %v155, 2.0
    %v234 = vmul.f32 %v160, 2.0
    %v235 = vmul.f32 %v165, 2.0
    %v236 = vmul.f32 %v170, 2.0
    %v237 = vmul.f32 %v175, 2.0
    %v238 = vmul.f32 %v180, 2.0
    %v239 = vmul.f32 %v185, 2.0
    %v240 = vmul.f32 %v190, 2.0
    %v241 = vmul.f32 %v195, 2.0
    %v242 = vmul.f32 %v200, 2.0
    %v243 = vmul.f32 %v205, 2.0
    %v244 = vmul.f32 %v210, 2.0
    %v245 = vmul.f32 %v215, 2.0
    %v246 = vmul.f32 %v220, 2.0
    %v247 = vmul.f32 %v225, 2.0
    %v248 = vmul.f32 %v230, 2.0
    %v249 = vld [vmem:[%s2] sm:$0xff]
    %v250 = vld [vmem:[%s2 + $0x8] sm:$0xff]
    %v251 = vld [vmem:[%s2 + $0x10] sm:$0xff]
    %v252 = vld [vmem:[%s2 + $0x18] sm:$0xff]
    %v253 = vld [vmem:[%s2 + $0x20] sm:$0xff]
    %v254 = vld [vmem:[%s2 + $0x28] sm:$0xff]
    %v255 = vld [vmem:[%s2 + $0x30] sm:$0xff]
    %v256 = vld [vmem:[%s2 + $0x38] sm:$0xff]
    %v257 = vld [vmem:[%s2 + $0x40] sm:$0xff]
    %v258 = vld [vmem:[%s2 + $0x48] sm:$0xff]
    %v259 = vld [vmem:[%s2 + $0x50] sm:$0xff]
    %v260 = vld [vmem:[%s2 + $0x58] sm:$0xff]
    %v261 = vld [vmem:[%s2 + $0x60] sm:$0xff]
    %v262 = vld [vmem:[%s2 + $0x68] sm:$0xff]
    %v263 = vld [vmem:[%s2 + $0x70] sm:$0xff]
    %v264 = vld [vmem:[%s2 + $0x78] sm:$0xff]
    %266 = vset.pattern.permute.xlu0 0
    %267 = vperm.xlu0 %266, %v249
    %v268 = vpop.permute.xlu0 %267
    %271 = vset.pattern.permute.xlu0 0
    %272 = vperm.xlu0 %271, %v250
    %v273 = vpop.permute.xlu0 %272
    %276 = vset.pattern.permute.xlu0 0
    %277 = vperm.xlu0 %276, %v251
    %v278 = vpop.permute.xlu0 %277
    %281 = vset.pattern.permute.xlu0 0
    %282 = vperm.xlu0 %281, %v252
    %v283 = vpop.permute.xlu0 %282
    %286 = vset.pattern.permute.xlu0 0
    %287 = vperm.xlu0 %286, %v253
    %v288 = vpop.permute.xlu0 %287
    %291 = vset.pattern.permute.xlu0 0
    %292 = vperm.xlu0 %291, %v254
    %v293 = vpop.permute.xlu0 %292
    %296 = vset.pattern.permute.xlu0 0
    %297 = vperm.xlu0 %296, %v255
    %v298 = vpop.permute.xlu0 %297
    %301 = vset.pattern.permute.xlu0 0
    %302 = vperm.xlu0 %301, %v256
    %v303 = vpop.permute.xlu0 %302
    %306 = vset.pattern.permute.xlu0 0
    %307 = vperm.xlu0 %306, %v257
    %v308 = vpop.permute.xlu0 %307
    %311 = vset.pattern.permute.xlu0 0
    %312 = vperm.xlu0 %311, %v258
    %v313 = vpop.permute.xlu0 %312
    %316 = vset.pattern.permute.xlu0 0
    %317 = vperm.xlu0 %316, %v259
    %v318 = vpop.permute.xlu0 %317
    %321 = vset.pattern.permute.xlu0 0
    %322 = vperm.xlu0 %321, %v260
    %v323 = vpop.permute.xlu0 %322
    %326 = vset.pattern.permute.xlu0 0
    %327 = vperm.xlu0 %326, %v261
    %v328 = vpop.permute.xlu0 %327
    %331 = vset.pattern.permute.xlu0 0
    %332 = vperm.xlu0 %331, %v262
    %v333 = vpop.permute.xlu0 %332
    %336 = vset.pattern.permute.xlu0 0
    %337 = vperm.xlu0 %336, %v263
    %v338 = vpop.permute.xlu0 %337
    %341 = vset.pattern.permute.xlu0 0
    %342 = vperm.xlu0 %341, %v264
    %v343 = vpop.permute.xlu0 %342
    %v345 = vsub.f32 %v233, %v268
    %v346 = vsub.f32 %v234, %v273
    %v347 = vsub.f32 %v235, %v278
    %v348 = vsub.f32 %v236, %v283
    %v349 = vsub.f32 %v237, %v288
    %v350 = vsub.f32 %v238, %v293
    %v351 = vsub.f32 %v239, %v298
    %v352 = vsub.f32 %v240, %v303
    %v353 = vsub.f32 %v241, %v308
    %v354 = vsub.f32 %v242, %v313
    %v355 = vsub.f32 %v243, %v318
    %v356 = vsub.f32 %v244, %v323
    %v357 = vsub.f32 %v245, %v328
    %v358 = vsub.f32 %v246, %v333
    %v359 = vsub.f32 %v247, %v338
    %v360 = vsub.f32 %v248, %v343
    %v361 = vld [vmem:[%s3] sm:$0x1]
    %v363 = vlaneseq
    %v364 = vshrl.u32 %v363, 7
    %v365 = vsub.s32 0, %v364
    %v366 = vrot.slane %v361, %v365
    %v368 = vsub.f32 %v345, %v366
    %v369 = vsub.f32 %v346, %v366
    %v370 = vsub.f32 %v347, %v366
    %v371 = vsub.f32 %v348, %v366
    %v372 = vsub.f32 %v349, %v366
    %v373 = vsub.f32 %v350, %v366
    %v374 = vsub.f32 %v351, %v366
    %v375 = vsub.f32 %v352, %v366
    %v376 = vsub.f32 %v353, %v366
    %v377 = vsub.f32 %v354, %v366
    %v378 = vsub.f32 %v355, %v366
    %v379 = vsub.f32 %v356, %v366
    %v380 = vsub.f32 %v357, %v366
    %v381 = vsub.f32 %v358, %v366
    %v382 = vsub.f32 %v359, %v366
    %v383 = vsub.f32 %v360, %v366
    %384 = vst [vmem:[#allocation2] sm:$0xff] %v368
    %385 = vst [vmem:[#allocation2 + $0x8] sm:$0xff] %v369
    %386 = vst [vmem:[#allocation2 + $0x10] sm:$0xff] %v370
    %387 = vst [vmem:[#allocation2 + $0x18] sm:$0xff] %v371
    %388 = vst [vmem:[#allocation2 + $0x20] sm:$0xff] %v372
    %389 = vst [vmem:[#allocation2 + $0x28] sm:$0xff] %v373
    %390 = vst [vmem:[#allocation2 + $0x30] sm:$0xff] %v374
    %391 = vst [vmem:[#allocation2 + $0x38] sm:$0xff] %v375
    %392 = vst [vmem:[#allocation2 + $0x40] sm:$0xff] %v376
    %393 = vst [vmem:[#allocation2 + $0x48] sm:$0xff] %v377
    %394 = vst [vmem:[#allocation2 + $0x50] sm:$0xff] %v378
    %395 = vst [vmem:[#allocation2 + $0x58] sm:$0xff] %v379
    %396 = vst [vmem:[#allocation2 + $0x60] sm:$0xff] %v380
    %397 = vst [vmem:[#allocation2 + $0x68] sm:$0xff] %v381
    %398 = vst [vmem:[#allocation2 + $0x70] sm:$0xff] %v382
    %399 = vst [vmem:[#allocation2 + $0x78] sm:$0xff] %v383
    // Predicated region
    $region18: #{tpu_custom_call.1} parent=1 // pred_check
      _
    $region19: #{tpu_custom_call.1} parent=1 // pred_check_branch
      %401 = sbr.rel (0) target = $region21
    $region20: #{tpu_custom_call.1} parent=1 // pred_region
      %s403 = ssub.s32 2048, 2048
      %404 = vsyncadd [#allocation3], %s403
      %s405 = sshll.u32 [#allocation2], 4
      %s406 = int_to_ptr.vmem [resolvable:$true] %s405
      %411 = dma.vmem_to_hbm [thread:$0]  %s406, 2048, %s4, [#allocation3], 128, 128, 8
    $region21: #{tpu_custom_call.1} parent=1 // pred_fallthru
      _
    // Predicated region
    $region22: #{tpu_custom_call.1} parent=1 // pred_check
      _
    $region23: #{tpu_custom_call.1} parent=1 // pred_check_branch
      %413 = sbr.rel (0) target = $region25
    $region24: #{tpu_custom_call.1} parent=1 // pred_region
      %414 = dma.done [#allocation3], 2048
    $region25: #{tpu_custom_call.1} parent=1 // pred_fallthru
      _
    %415 = vsyncpa [#allocation3], 1

</llo_original>
